<compile_context>
chip_gen: v7x
topology: tpu7x:2x2x1
jax: 0.10.0
libtpu: 0.0.40
codegen_flags: <defaults>
</compile_context>

<pallas_src>
import jax
import jax.numpy as jnp
from jax.experimental import pallas as pl
from jax.experimental.pallas import tpu as pltpu


def cnn_kernel(xt_ref, p_ref, s_ref, w1_ref, b1_ref, w2_ref, b2_ref,
               wf_ref, bf_ref, o_ref):
    # xt_ref: (M, K*Cin)   bf16  im2col'd input, M = B*L
    # p_ref : (B, M)       bf16  pooling / batch-select 0/1 matrix
    # s_ref : (K-1, M, M)  bf16  superdiagonal shift matrices S[k-1][i, i+k] = 1
    # w1_ref: (K*Cin, Hp)  bf16
    # b1_ref: (1, Hp)      f32
    # w2_ref: (K, Hp, Hp)  bf16
    # b2_ref: (1, Hp)      f32
    # wf_ref: (Hp, Op)     bf16  (already scaled by 1/L2)
    # bf_ref: (1, Op)      f32
    # o_ref : (B, Op)      f32
    f32 = jnp.float32
    bf16 = jnp.bfloat16
    K = w2_ref.shape[0]

    # ---- Conv1d #1: all K taps pre-gathered along channels -> ONE matmul ----
    acc1 = jnp.dot(xt_ref[...], w1_ref[...], preferred_element_type=f32)  # (M, Hp)
    h1 = jnp.maximum(acc1 + b1_ref[...], 0.0).astype(bf16)                # (M, Hp)

    # ---- Conv1d #2: tap k uses h1 shifted by k rows.  Exact tile-aligned ----
    # shift via tiny 0/1 superdiagonal matmuls; rows that would alias the
    # next batch item are excluded by the pooling matrix below.
    acc2 = jnp.dot(h1, w2_ref[0], preferred_element_type=f32)             # (M, Hp)
    for k in range(1, K):                                                 # static
        hk = jnp.dot(s_ref[k - 1], h1, preferred_element_type=f32).astype(bf16)
        acc2 = acc2 + jnp.dot(hk, w2_ref[k], preferred_element_type=f32)
    h2 = jnp.maximum(acc2 + b2_ref[...], 0.0).astype(bf16)                # (M, Hp)

    # ---- valid-time mask + mean-over-time + batch gather fused into one -----
    # matmul with the 0/1 selection matrix (1/L2 folded into wf), then FC.
    pooled = jnp.dot(p_ref[...], h2, preferred_element_type=f32)          # (B, Hp)
    out = jnp.dot(pooled.astype(bf16), wf_ref[...],
                  preferred_element_type=f32) + bf_ref[...]               # (B, Op)
    o_ref[...] = out.astype(o_ref.dtype)


def _round_up(n, m):
    return ((n + m - 1) // m) * m


def _pad_axis(a, target, axis):
    pad = [(0, 0)] * a.ndim
    pad[axis] = (0, target - a.shape[axis])
    return jnp.pad(a, pad)


def cnn_model_forward(x, w1, b1, w2, b2, wf, bf):
    """x: (B, L, C_in) float32. Returns (B, output_dim) float32."""
    B, L, Cin = x.shape
    K, _, H = w1.shape
    O = wf.shape[1]
    L1 = L - (K - 1)
    L2 = L1 - (K - 1)
    assert L2 >= 1, "sequence too short for two valid kernel_size convolutions"

    Hp = _round_up(H, 128)
    Op = _round_up(O, 128)
    M = B * L
    KCin = K * Cin
    Km1 = max(K - 1, 1)

    bf16 = jnp.bfloat16
    f32 = jnp.float32

    # --- host-side im2col for conv #1: gather the K taps along channels ------
    x_taps = jnp.concatenate(
        [jnp.pad(x[:, k:, :], ((0, 0), (0, k), (0, 0))) for k in range(K)],
        axis=-1)                                        # (B, L, K*Cin)
    xt = x_taps.reshape(M, KCin).astype(bf16)           # (M, K*Cin)

    # --- weights / biases, lane-padded (exact: zeros + ReLU(0)=0) ------------
    w1p = _pad_axis(w1.reshape(KCin, H), Hp, 1).astype(bf16)        # (K*Cin, Hp)
    b1p = _pad_axis(b1, Hp, 1).astype(f32)                          # (1, Hp)
    w2p = _pad_axis(_pad_axis(w2, Hp, 1), Hp, 2).astype(bf16)       # (K, Hp, Hp)
    b2p = _pad_axis(b2, Hp, 1).astype(f32)                          # (1, Hp)
    wfp = _pad_axis(_pad_axis(wf / L2, Hp, 0), Op, 1).astype(bf16)  # (Hp, Op)
    bfp = _pad_axis(bf, Op, 1).astype(f32)                          # (1, Op)

    # --- 0/1 superdiagonal shift matrices for conv #2 taps k = 1..K-1 --------
    r = jnp.arange(M)[:, None]
    c = jnp.arange(M)[None, :]
    S = jnp.stack([(c == r + k) for k in range(1, Km1 + 1)]).astype(bf16)

    # --- pooling / batch-select matrix: P[b, b*L + t] = 1 iff t < L2 ---------
    b_idx = jnp.arange(B)[:, None]
    flat = jnp.arange(M)[None, :]
    P = ((flat >= b_idx * L) & (flat < b_idx * L + L2)).astype(bf16)  # (B, M)

    out = pl.pallas_call(
        cnn_kernel,
        out_shape=jax.ShapeDtypeStruct((B, Op), jnp.float32),
        grid=(1,),
        in_specs=[
            pl.BlockSpec((M, KCin), lambda i: (0, 0)),
            pl.BlockSpec((B, M), lambda i: (0, 0)),
            pl.BlockSpec((Km1, M, M), lambda i: (0, 0, 0)),
            pl.BlockSpec((KCin, Hp), lambda i: (0, 0)),
            pl.BlockSpec((1, Hp), lambda i: (0, 0)),
            pl.BlockSpec((K, Hp, Hp), lambda i: (0, 0, 0)),
            pl.BlockSpec((1, Hp), lambda i: (0, 0)),
            pl.BlockSpec((Hp, Op), lambda i: (0, 0)),
            pl.BlockSpec((1, Op), lambda i: (0, 0)),
        ],
        out_specs=pl.BlockSpec((B, Op), lambda i: (0, 0)),
        compiler_params=pltpu.CompilerParams(
            dimension_semantics=("arbitrary",),
        ),
    )(xt, P, S, w1p, b1p, w2p, b2p, wfp, bfp)

    return out[:, :O]


def reference_forward(x, w1, b1, w2, b2, wf, bf):
    """Pure-JAX f32 reference mirroring the PyTorch forward."""
    K = w1.shape[0]
    L = x.shape[1]
    L1 = L - K + 1
    h1 = sum(jnp.einsum("bti,io->bto", x[:, k:k + L1, :], w1[k]) for k in range(K))
    h1 = jax.nn.relu(h1 + b1[0])
    L2 = L1 - K + 1
    h2 = sum(jnp.einsum("bti,io->bto", h1[:, k:k + L2, :], w2[k]) for k in range(K))
    h2 = jax.nn.relu(h2 + b2[0])
    pooled = h2.mean(axis=1)
    return pooled @ wf + bf[0]


if __name__ == "__main__":
    # Small shapes implied by the module.
    B, L = 2, 16
    input_dim, hidden_dim, output_dim = 4, 32, 8
    K = 3  # kernel_size

    key = jax.random.PRNGKey(0)
    kx, k1, kb1, k2, kb2, kf, kbf = jax.random.split(key, 7)

    x = jax.random.normal(kx, (B, L, input_dim), dtype=jnp.float32)
    w1 = jax.random.normal(k1, (K, input_dim, hidden_dim), jnp.float32) * 0.1
    b1 = jax.random.normal(kb1, (1, hidden_dim), jnp.float32) * 0.1
    w2 = jax.random.normal(k2, (K, hidden_dim, hidden_dim), jnp.float32) * 0.1
    b2 = jax.random.normal(kb2, (1, hidden_dim), jnp.float32) * 0.1
    wf = jax.random.normal(kf, (hidden_dim, output_dim), jnp.float32) * 0.1
    bf = jax.random.normal(kbf, (1, output_dim), jnp.float32) * 0.1

    fwd = jax.jit(cnn_model_forward)
    out = jax.block_until_ready(fwd(x, w1, b1, w2, b2, wf, bf))

    ref = reference_forward(x, w1, b1, w2, b2, wf, bf)
    assert out.shape == (B, output_dim)
    # bf16 matmul inputs (f32 accumulation) -> slightly loosened tolerance.
    assert jnp.allclose(out, ref, atol=2e-2, rtol=2e-2), "mismatch vs reference"

    print("KERNEL_OK")
</pallas_src>

<mosaic_0001>
module attributes {stable_mosaic.version = 11 : i64} {
  func.func @cnn_kernel(%arg0: i32, %arg1: memref<32x12xbf16, #tpu.memory_space<vmem>>, %arg2: memref<2x32xbf16, #tpu.memory_space<vmem>>, %arg3: memref<2x32x32xbf16, #tpu.memory_space<vmem>>, %arg4: memref<12x128xbf16, #tpu.memory_space<vmem>>, %arg5: memref<1x128xf32, #tpu.memory_space<vmem>>, %arg6: memref<3x128x128xbf16, #tpu.memory_space<vmem>>, %arg7: memref<1x128xf32, #tpu.memory_space<vmem>>, %arg8: memref<128x128xbf16, #tpu.memory_space<vmem>>, %arg9: memref<1x128xf32, #tpu.memory_space<vmem>>, %arg10: memref<2x128xf32, #tpu.memory_space<vmem>>) attributes {dimension_semantics = [#tpu.dimension_semantics<arbitrary>], iteration_bounds = array<i64: 1>, scalar_prefetch = 0 : i64, scratch_operands = 0 : i64, tpu.core_type = #tpu.core_type<tc>, window_params = [{pipeline_mode = #tpu.pipeline_mode<synchronous>, transform_indices = @transform_0, window_bounds = array<i64: 32, 12>}, {pipeline_mode = #tpu.pipeline_mode<synchronous>, transform_indices = @transform_1, window_bounds = array<i64: 2, 32>}, {pipeline_mode = #tpu.pipeline_mode<synchronous>, transform_indices = @transform_2, window_bounds = array<i64: 2, 32, 32>}, {pipeline_mode = #tpu.pipeline_mode<synchronous>, transform_indices = @transform_3, window_bounds = array<i64: 12, 128>}, {pipeline_mode = #tpu.pipeline_mode<synchronous>, transform_indices = @transform_4, window_bounds = array<i64: 1, 128>}, {pipeline_mode = #tpu.pipeline_mode<synchronous>, transform_indices = @transform_5, window_bounds = array<i64: 3, 128, 128>}, {pipeline_mode = #tpu.pipeline_mode<synchronous>, transform_indices = @transform_6, window_bounds = array<i64: 1, 128>}, {pipeline_mode = #tpu.pipeline_mode<synchronous>, transform_indices = @transform_7, window_bounds = array<i64: 128, 128>}, {pipeline_mode = #tpu.pipeline_mode<synchronous>, transform_indices = @transform_8, window_bounds = array<i64: 1, 128>}, {pipeline_mode = #tpu.pipeline_mode<synchronous>, transform_indices = @transform_9, window_bounds = array<i64: 2, 128>}]} {
    %c0 = arith.constant 0 : index
    %c0_0 = arith.constant 0 : index
    %0 = vector.load %arg1[%c0, %c0_0] : memref<32x12xbf16, #tpu.memory_space<vmem>>, vector<32x12xbf16>
    %c0_1 = arith.constant 0 : index
    %c0_2 = arith.constant 0 : index
    %1 = vector.load %arg4[%c0_1, %c0_2] : memref<12x128xbf16, #tpu.memory_space<vmem>>, vector<12x128xbf16>
    %cst = arith.constant dense<0.000000e+00> : vector<32x128xf32>
    %2 = tpu.matmul %0, %1, %cst {dimension_numbers = #tpu.dot_dimension_numbers<[1], [0], [0], [1], [0, 0, 1, 1], [], []>} : vector<32x12xbf16>, vector<12x128xbf16>, vector<32x128xf32> -> vector<32x128xf32>
    %c0_3 = arith.constant 0 : index
    %c0_4 = arith.constant 0 : index
    %3 = vector.load %arg5[%c0_3, %c0_4] : memref<1x128xf32, #tpu.memory_space<vmem>>, vector<1x128xf32>
    %4 = vector.broadcast %3 : vector<1x128xf32> to vector<32x128xf32>
    %5 = arith.addf %2, %4 : vector<32x128xf32>
    %cst_5 = arith.constant 0.000000e+00 : f32
    %6 = vector.broadcast %cst_5 : f32 to vector<32x128xf32>
    %7 = arith.maximumf %5, %6 : vector<32x128xf32>
    %8 = arith.truncf %7 : vector<32x128xf32> to vector<32x128xbf16>
    %c0_6 = arith.constant 0 : index
    %c0_7 = arith.constant 0 : index
    %c0_8 = arith.constant 0 : index
    %9 = vector.load %arg6[%c0_6, %c0_7, %c0_8] : memref<3x128x128xbf16, #tpu.memory_space<vmem>>, vector<1x128x128xbf16>
    %10 = vector.shape_cast %9 : vector<1x128x128xbf16> to vector<128x128xbf16>
    %cst_9 = arith.constant dense<0.000000e+00> : vector<32x128xf32>
    %11 = tpu.matmul %8, %10, %cst_9 {dimension_numbers = #tpu.dot_dimension_numbers<[1], [0], [0], [1], [0, 0, 1, 1], [], []>} : vector<32x128xbf16>, vector<128x128xbf16>, vector<32x128xf32> -> vector<32x128xf32>
    %c0_10 = arith.constant 0 : index
    %c0_11 = arith.constant 0 : index
    %c0_12 = arith.constant 0 : index
    %12 = vector.load %arg3[%c0_10, %c0_11, %c0_12] : memref<2x32x32xbf16, #tpu.memory_space<vmem>>, vector<1x32x32xbf16>
    %13 = vector.shape_cast %12 : vector<1x32x32xbf16> to vector<32x32xbf16>
    %cst_13 = arith.constant dense<0.000000e+00> : vector<32x128xf32>
    %14 = tpu.matmul %13, %8, %cst_13 {dimension_numbers = #tpu.dot_dimension_numbers<[1], [0], [0], [1], [0, 0, 1, 1], [], []>} : vector<32x32xbf16>, vector<32x128xbf16>, vector<32x128xf32> -> vector<32x128xf32>
    %15 = arith.truncf %14 : vector<32x128xf32> to vector<32x128xbf16>
    %c1 = arith.constant 1 : index
    %c0_14 = arith.constant 0 : index
    %c0_15 = arith.constant 0 : index
    %16 = vector.load %arg6[%c1, %c0_14, %c0_15] : memref<3x128x128xbf16, #tpu.memory_space<vmem>>, vector<1x128x128xbf16>
    %17 = vector.shape_cast %16 : vector<1x128x128xbf16> to vector<128x128xbf16>
    %cst_16 = arith.constant dense<0.000000e+00> : vector<32x128xf32>
    %18 = tpu.matmul %15, %17, %cst_16 {dimension_numbers = #tpu.dot_dimension_numbers<[1], [0], [0], [1], [0, 0, 1, 1], [], []>} : vector<32x128xbf16>, vector<128x128xbf16>, vector<32x128xf32> -> vector<32x128xf32>
    %19 = arith.addf %11, %18 : vector<32x128xf32>
    %c1_17 = arith.constant 1 : index
    %c0_18 = arith.constant 0 : index
    %c0_19 = arith.constant 0 : index
    %20 = vector.load %arg3[%c1_17, %c0_18, %c0_19] : memref<2x32x32xbf16, #tpu.memory_space<vmem>>, vector<1x32x32xbf16>
    %21 = vector.shape_cast %20 : vector<1x32x32xbf16> to vector<32x32xbf16>
    %cst_20 = arith.constant dense<0.000000e+00> : vector<32x128xf32>
    %22 = tpu.matmul %21, %8, %cst_20 {dimension_numbers = #tpu.dot_dimension_numbers<[1], [0], [0], [1], [0, 0, 1, 1], [], []>} : vector<32x32xbf16>, vector<32x128xbf16>, vector<32x128xf32> -> vector<32x128xf32>
    %23 = arith.truncf %22 : vector<32x128xf32> to vector<32x128xbf16>
    %c2 = arith.constant 2 : index
    %c0_21 = arith.constant 0 : index
    %c0_22 = arith.constant 0 : index
    %24 = vector.load %arg6[%c2, %c0_21, %c0_22] : memref<3x128x128xbf16, #tpu.memory_space<vmem>>, vector<1x128x128xbf16>
    %25 = vector.shape_cast %24 : vector<1x128x128xbf16> to vector<128x128xbf16>
    %cst_23 = arith.constant dense<0.000000e+00> : vector<32x128xf32>
    %26 = tpu.matmul %23, %25, %cst_23 {dimension_numbers = #tpu.dot_dimension_numbers<[1], [0], [0], [1], [0, 0, 1, 1], [], []>} : vector<32x128xbf16>, vector<128x128xbf16>, vector<32x128xf32> -> vector<32x128xf32>
    %27 = arith.addf %19, %26 : vector<32x128xf32>
    %c0_24 = arith.constant 0 : index
    %c0_25 = arith.constant 0 : index
    %28 = vector.load %arg7[%c0_24, %c0_25] : memref<1x128xf32, #tpu.memory_space<vmem>>, vector<1x128xf32>
    %29 = vector.broadcast %28 : vector<1x128xf32> to vector<32x128xf32>
    %30 = arith.addf %27, %29 : vector<32x128xf32>
    %cst_26 = arith.constant 0.000000e+00 : f32
    %31 = vector.broadcast %cst_26 : f32 to vector<32x128xf32>
    %32 = arith.maximumf %30, %31 : vector<32x128xf32>
    %33 = arith.truncf %32 : vector<32x128xf32> to vector<32x128xbf16>
    %c0_27 = arith.constant 0 : index
    %c0_28 = arith.constant 0 : index
    %34 = vector.load %arg2[%c0_27, %c0_28] : memref<2x32xbf16, #tpu.memory_space<vmem>>, vector<2x32xbf16>
    %cst_29 = arith.constant dense<0.000000e+00> : vector<2x128xf32>
    %35 = tpu.matmul %34, %33, %cst_29 {dimension_numbers = #tpu.dot_dimension_numbers<[1], [0], [0], [1], [0, 0, 1, 1], [], []>} : vector<2x32xbf16>, vector<32x128xbf16>, vector<2x128xf32> -> vector<2x128xf32>
    %36 = arith.truncf %35 : vector<2x128xf32> to vector<2x128xbf16>
    %c0_30 = arith.constant 0 : index
    %c0_31 = arith.constant 0 : index
    %37 = vector.load %arg8[%c0_30, %c0_31] : memref<128x128xbf16, #tpu.memory_space<vmem>>, vector<128x128xbf16>
    %cst_32 = arith.constant dense<0.000000e+00> : vector<2x128xf32>
    %38 = tpu.matmul %36, %37, %cst_32 {dimension_numbers = #tpu.dot_dimension_numbers<[1], [0], [0], [1], [0, 0, 1, 1], [], []>} : vector<2x128xbf16>, vector<128x128xbf16>, vector<2x128xf32> -> vector<2x128xf32>
    %c0_33 = arith.constant 0 : index
    %c0_34 = arith.constant 0 : index
    %39 = vector.load %arg9[%c0_33, %c0_34] : memref<1x128xf32, #tpu.memory_space<vmem>>, vector<1x128xf32>
    %40 = vector.broadcast %39 : vector<1x128xf32> to vector<2x128xf32>
    %41 = arith.addf %38, %40 : vector<2x128xf32>
    %c0_35 = arith.constant 0 : index
    %c0_36 = arith.constant 0 : index
    %42 = vector.load %arg10[%c0_35, %c0_36] : memref<2x128xf32, #tpu.memory_space<vmem>>, vector<2x128xf32>
    tpu.vector_store %arg10[%c0_35, %c0_36], %41 {strides = array<i32>} : memref<2x128xf32, #tpu.memory_space<vmem>>, vector<2x128xf32>,
    return
  }
  func.func @transform_0(%arg0: i32) -> (i32, i32) {
    %c0_i32 = arith.constant 0 : i32
    %c0_i32_0 = arith.constant 0 : i32
    %c0_i32_1 = arith.constant 0 : i32
    return %c0_i32, %c0_i32_0 : i32, i32
  }
  func.func @transform_1(%arg0: i32) -> (i32, i32) {
    %c0_i32 = arith.constant 0 : i32
    %c0_i32_0 = arith.constant 0 : i32
    %c0_i32_1 = arith.constant 0 : i32
    return %c0_i32, %c0_i32_0 : i32, i32
  }
  func.func @transform_2(%arg0: i32) -> (i32, i32, i32) {
    %c0_i32 = arith.constant 0 : i32
    %c0_i32_0 = arith.constant 0 : i32
    %c0_i32_1 = arith.constant 0 : i32
    %c0_i32_2 = arith.constant 0 : i32
    return %c0_i32, %c0_i32_0, %c0_i32_1 : i32, i32, i32
  }
  func.func @transform_3(%arg0: i32) -> (i32, i32) {
    %c0_i32 = arith.constant 0 : i32
    %c0_i32_0 = arith.constant 0 : i32
    %c0_i32_1 = arith.constant 0 : i32
    return %c0_i32, %c0_i32_0 : i32, i32
  }
  func.func @transform_4(%arg0: i32) -> (i32, i32) {
    %c0_i32 = arith.constant 0 : i32
    %c0_i32_0 = arith.constant 0 : i32
    %c0_i32_1 = arith.constant 0 : i32
    return %c0_i32, %c0_i32_0 : i32, i32
  }
  func.func @transform_5(%arg0: i32) -> (i32, i32, i32) {
    %c0_i32 = arith.constant 0 : i32
    %c0_i32_0 = arith.constant 0 : i32
    %c0_i32_1 = arith.constant 0 : i32
    %c0_i32_2 = arith.constant 0 : i32
    return %c0_i32, %c0_i32_0, %c0_i32_1 : i32, i32, i32
  }
  func.func @transform_6(%arg0: i32) -> (i32, i32) {
    %c0_i32 = arith.constant 0 : i32
    %c0_i32_0 = arith.constant 0 : i32
    %c0_i32_1 = arith.constant 0 : i32
    return %c0_i32, %c0_i32_0 : i32, i32
  }
  func.func @transform_7(%arg0: i32) -> (i32, i32) {
    %c0_i32 = arith.constant 0 : i32
    %c0_i32_0 = arith.constant 0 : i32
    %c0_i32_1 = arith.constant 0 : i32
    return %c0_i32, %c0_i32_0 : i32, i32
  }
  func.func @transform_8(%arg0: i32) -> (i32, i32) {
    %c0_i32 = arith.constant 0 : i32
    %c0_i32_0 = arith.constant 0 : i32
    %c0_i32_1 = arith.constant 0 : i32
    return %c0_i32, %c0_i32_0 : i32, i32
  }
  func.func @transform_9(%arg0: i32) -> (i32, i32) {
    %c0_i32 = arith.constant 0 : i32
    %c0_i32_0 = arith.constant 0 : i32
    %c0_i32_1 = arith.constant 0 : i32
    return %c0_i32, %c0_i32_0 : i32, i32
  }
}

</mosaic_0001>

<llo_original>
// kernel: cnn_model_forward.1
$region0: #{cnn_model_forward.1}
  #allocation0 [shape = 'u32[]', space=smem, size = 0x4, offset = 0x4, fixed_abs, tag = 'smem constant byte address 0x4 - core index']
  #allocation1 [shape = 'u32[144,128]{1,0:T(1,128)}', space=vmem, size = 0x12000, scoped, tag = 'internal scratch']
  %s0 = inlined_call_operand.vmem [shape: bf16[32,12], index: 0, kind: input, shape index: {}]
  %s1 = inlined_call_operand.vmem [shape: bf16[2,32], index: 1, kind: input, shape index: {}]
  %s2 = inlined_call_operand.vmem [shape: bf16[2,32,32], index: 2, kind: input, shape index: {}]
  %s3 = inlined_call_operand.vmem [shape: bf16[12,128], index: 3, kind: input, shape index: {}]
  %s4 = inlined_call_operand.vmem [shape: f32[1,128], index: 4, kind: input, shape index: {}]
  %s5 = inlined_call_operand.vmem [shape: bf16[3,128,128], index: 5, kind: input, shape index: {}]
  %s6 = inlined_call_operand.vmem [shape: f32[1,128], index: 6, kind: input, shape index: {}]
  %s7 = inlined_call_operand.vmem [shape: bf16[128,128], index: 7, kind: input, shape index: {}]
  %s8 = inlined_call_operand.vmem [shape: f32[1,128], index: 8, kind: input, shape index: {}]
  %s9 = inlined_call_operand.hbm [shape: f32[2,128], index: 9, kind: output, shape index: {}]
  %s10 = sld [smem:[#allocation0]]
  $region46: #{cnn_model_forward.1} parent=0
    _
  %s12 = ssub.s32 1, %s10
  %s13 = scalar_select 0, %s12, %s10
  $region1: #{cnn_model_forward.1} parent=0
    #allocation2 [shape = 'u8[1024]{0}', space=vmem, size = 0x400, scoped, tag = 'output window, operand 0, single buffered']
    #allocation3 [shape = 's32[1]{0}', space=sflag, size = 0x4, scoped, tag = 'scoped memory for cnn_model_forward.1']
    %14 = vsyncpa [#allocation3], 0
    // Predicated region
    $region2: #{cnn_model_forward.1} parent=1 // pred_check
      _
    $region3: #{cnn_model_forward.1} parent=1 // pred_check_branch
      %16 = sbr.rel (0) target = $region5
    $region4: #{cnn_model_forward.1} parent=1 // pred_region
      _
    $region5: #{cnn_model_forward.1} parent=1 // pred_fallthru
      _
    // Predicated region
    $region6: #{cnn_model_forward.1} parent=1 // pred_check
      _
    $region7: #{cnn_model_forward.1} parent=1 // pred_check_branch
      %18 = sbr.rel (0) target = $region9
    $region8: #{cnn_model_forward.1} parent=1 // pred_region
      _
    $region9: #{cnn_model_forward.1} parent=1 // pred_fallthru
      _
    // Predicated region
    $region10: #{cnn_model_forward.1} parent=1 // pred_check
      _
    $region11: #{cnn_model_forward.1} parent=1 // pred_check_branch
      %20 = sbr.rel (0) target = $region13
    $region12: #{cnn_model_forward.1} parent=1 // pred_region
      _
    $region13: #{cnn_model_forward.1} parent=1 // pred_fallthru
      _
    // Predicated region
    $region14: #{cnn_model_forward.1} parent=1 // pred_check
      _
    $region15: #{cnn_model_forward.1} parent=1 // pred_check_branch
      %22 = sbr.rel (0) target = $region17
    $region16: #{cnn_model_forward.1} parent=1 // pred_region
      _
    $region17: #{cnn_model_forward.1} parent=1 // pred_fallthru
      _
    // Predicated region
    $region18: #{cnn_model_forward.1} parent=1 // pred_check
      _
    $region19: #{cnn_model_forward.1} parent=1 // pred_check_branch
      %24 = sbr.rel (0) target = $region21
    $region20: #{cnn_model_forward.1} parent=1 // pred_region
      _
    $region21: #{cnn_model_forward.1} parent=1 // pred_fallthru
      _
    // Predicated region
    $region22: #{cnn_model_forward.1} parent=1 // pred_check
      _
    $region23: #{cnn_model_forward.1} parent=1 // pred_check_branch
      %26 = sbr.rel (0) target = $region25
    $region24: #{cnn_model_forward.1} parent=1 // pred_region
      _
    $region25: #{cnn_model_forward.1} parent=1 // pred_fallthru
      _
    // Predicated region
    $region26: #{cnn_model_forward.1} parent=1 // pred_check
      _
    $region27: #{cnn_model_forward.1} parent=1 // pred_check_branch
      %28 = sbr.rel (0) target = $region29
    $region28: #{cnn_model_forward.1} parent=1 // pred_region
      _
    $region29: #{cnn_model_forward.1} parent=1 // pred_fallthru
      _
    // Predicated region
    $region30: #{cnn_model_forward.1} parent=1 // pred_check
      _
    $region31: #{cnn_model_forward.1} parent=1 // pred_check_branch
      %30 = sbr.rel (0) target = $region33
    $region32: #{cnn_model_forward.1} parent=1 // pred_region
      _
    $region33: #{cnn_model_forward.1} parent=1 // pred_fallthru
      _
    // Predicated region
    $region34: #{cnn_model_forward.1} parent=1 // pred_check
      _
    $region35: #{cnn_model_forward.1} parent=1 // pred_check_branch
      %32 = sbr.rel (0) target = $region37
    $region36: #{cnn_model_forward.1} parent=1 // pred_region
      _
    $region37: #{cnn_model_forward.1} parent=1 // pred_fallthru
      _
    %v34 = vld [vmem:[%s0] sm:$0xf]
    %v35 = vld [vmem:[%s0 + $0x4] sm:$0xf]
    %v36 = vld [vmem:[%s0 + $0x8] sm:$0xf]
    %v37 = vld [vmem:[%s0 + $0xc] sm:$0xf]
    %v38 = vld [vmem:[%s3] sm:$0xf]
    %v39 = vld [vmem:[%s3 + $0x4] sm:$0x3]
    %v40 = vld [vmem:[%s4] sm:$0x1]
    %v42 = vlaneseq
    %v43 = vshrl.u32 %v42, 7
    %v44 = vsub.s32 0, %v43
    %v45 = vrot.slane %v40, %v44
    %v51 = vunpack.c.l.b16 %v34
    %v52 = vunpack.c.l.b16 %v35
    %v53 = vunpack.c.l.b16 %v36
    %v54 = vunpack.c.l.b16 %v37
    %v55 = vpack.c.b16 %v52, %v51
    %v56 = vpack.c.b16 %v54, %v53
    %v59 = vunpack.c.l.b16 %v38
    %v60 = vunpack.c.l.b16 %v39
    %v61 = vpack.c.b16 %v60, %v59
    %vm62 = vcmask 97280
    %v64 = vsel %vm62, %v55, 0
    %v67 = vsel %vm62, %v56, 0
    %vm69 = vcmask 1045504
    %v71 = vsel %vm69, %v61, 0
    %73 = vmatprep.subr.bf16.mxu0 0
    %74 = vmatpush1.bf16.msra.mxu0 %v71
    %75 = vmatprep.subr.bf16.mxu0 0
    %76 = vmatpush1.bf16.msra.mxu0 0
    %77 = vmatprep.subr.bf16.mxu0 0
    %78 = vmatpush1.bf16.msra.mxu0 0
    %79 = vmatprep.subr.bf16.mxu0 0
    %80 = vmatpush1.bf16.msra.mxu0 0
    %81 = vmatprep.subr.bf16.mxu0 0
    %82 = vmatpush1.bf16.msra.mxu0 0
    %83 = vmatprep.subr.bf16.mxu0 0
    %84 = vmatpush1.bf16.msra.mxu0 0
    %85 = vmatprep.subr.bf16.mxu0 0
    %86 = vmatpush1.bf16.msra.mxu0 0
    %87 = vmatprep.subr.bf16.mxu0 0
    %88 = vmatpush1.bf16.msra.mxu0 0
    %89 = vmatprep.subr.bf16.mxu0 0
    %90 = vmatpush1.bf16.msra.mxu0 0
    %91 = vmatprep.subr.bf16.mxu0 0
    %92 = vmatpush1.bf16.msra.mxu0 0
    %93 = vmatprep.subr.bf16.mxu0 0
    %94 = vmatpush1.bf16.msra.mxu0 0
    %95 = vmatprep.subr.bf16.mxu0 0
    %96 = vmatpush1.bf16.msra.mxu0 0
    %97 = vmatprep.subr.bf16.mxu0 0
    %98 = vmatpush1.bf16.msra.mxu0 0
    %99 = vmatprep.subr.bf16.mxu0 0
    %100 = vmatpush1.bf16.msra.mxu0 0
    %101 = vmatprep.subr.bf16.mxu0 0
    %102 = vmatpush1.bf16.msra.mxu0 0
    %103 = vmatprep.subr.bf16.mxu0 0
    %104 = vmatpush1.bf16.msra.mxu0 0
    %105 = vmatprep.mubr.bf16.mxu0 0
    %106 = vmatmul.mubr.bf16.gmra.mrb[0].mxu0 %v64
    %v107 = vpop.f32.mrb[0].mxu0
    %v108 = vadd.f32 %v45, %v107
    %v109 = vpop.f32.mrb[0].mxu0
    %v110 = vpop.f32.mrb[0].mxu0
    %v111 = vadd.f32 %v45, %v110
    %v112 = vpop.f32.mrb[0].mxu0
    %113 = vmatprep.mubr.bf16.mxu0 0
    %114 = vmatmul.mubr.bf16.gmra.mrb[0].mxu0 %v67
    %v115 = vpop.f32.mrb[0].mxu0
    %v116 = vadd.f32 %v45, %v115
    %v117 = vpop.f32.mrb[0].mxu0
    %v118 = vpop.f32.mrb[0].mxu0
    %v119 = vadd.f32 %v45, %v118
    %v120 = vpop.f32.mrb[0].mxu0
    %121 = vdwg.mxu0
    %v122 = vmax.f32 %v108, 0.0
    %v123 = vmax.f32 %v111, 0.0
    %v124 = vmax.f32 %v116, 0.0
    %v125 = vmax.f32 %v119, 0.0
    %v126 = vpack.c.bf16 %v123, %v122
    %v127 = vpack.c.bf16 %v125, %v124
    %v128 = vld [vmem:[%s5] sm:$0xf]
    %v129 = vld [vmem:[%s5 + $0x4] sm:$0xf]
    %v130 = vld [vmem:[%s5 + $0x8] sm:$0xf]
    %v131 = vld [vmem:[%s5 + $0xc] sm:$0xf]
    %v132 = vld [vmem:[%s5 + $0x10] sm:$0xf]
    %v133 = vld [vmem:[%s5 + $0x14] sm:$0xf]
    %v134 = vld [vmem:[%s5 + $0x18] sm:$0xf]
    %v135 = vld [vmem:[%s5 + $0x1c] sm:$0xf]
    %v136 = vld [vmem:[%s5 + $0x20] sm:$0xf]
    %v137 = vld [vmem:[%s5 + $0x24] sm:$0xf]
    %v138 = vld [vmem:[%s5 + $0x28] sm:$0xf]
    %v139 = vld [vmem:[%s5 + $0x2c] sm:$0xf]
    %v140 = vld [vmem:[%s5 + $0x30] sm:$0xf]
    %v141 = vld [vmem:[%s5 + $0x34] sm:$0xf]
    %v142 = vld [vmem:[%s5 + $0x38] sm:$0xf]
    %v143 = vld [vmem:[%s5 + $0x3c] sm:$0xf]
    %v144 = vld [vmem:[%s2] sm:$0xf]
    %v145 = vld [vmem:[%s2 + $0x4] sm:$0xf]
    %v146 = vld [vmem:[%s2 + $0x8] sm:$0xf]
    %v147 = vld [vmem:[%s2 + $0xc] sm:$0xf]
    %v152 = vunpack.c.l.b16 %v144
    %v153 = vunpack.c.l.b16 %v145
    %v154 = vunpack.c.l.b16 %v146
    %v155 = vunpack.c.l.b16 %v147
    %v156 = vpack.c.b16 %v153, %v152
    %v157 = vpack.c.b16 %v155, %v154
    %vm158 = vcmask 261120
    %v160 = vsel %vm158, %v156, 0
    %v163 = vsel %vm158, %v157, 0
    %165 = vmatprep.subr.bf16.mxu0 0
    %166 = vmatpush1.bf16.msra.mxu0 %v126
    %167 = vmatprep.subr.bf16.mxu0 0
    %168 = vmatpush1.bf16.msra.mxu0 %v127
    %169 = vmatprep.subr.bf16.mxu0 0
    %170 = vmatpush1.bf16.msra.mxu0 0
    %171 = vmatprep.subr.bf16.mxu0 0
    %172 = vmatpush1.bf16.msra.mxu0 0
    %173 = vmatprep.subr.bf16.mxu0 0
    %174 = vmatpush1.bf16.msra.mxu0 0
    %175 = vmatprep.subr.bf16.mxu0 0
    %176 = vmatpush1.bf16.msra.mxu0 0
    %177 = vmatprep.subr.bf16.mxu0 0
    %178 = vmatpush1.bf16.msra.mxu0 0
    %179 = vmatprep.subr.bf16.mxu0 0
    %180 = vmatpush1.bf16.msra.mxu0 0
    %181 = vmatprep.subr.bf16.mxu0 0
    %182 = vmatpush1.bf16.msra.mxu0 0
    %183 = vmatprep.subr.bf16.mxu0 0
    %184 = vmatpush1.bf16.msra.mxu0 0
    %185 = vmatprep.subr.bf16.mxu0 0
    %186 = vmatpush1.bf16.msra.mxu0 0
    %187 = vmatprep.subr.bf16.mxu0 0
    %188 = vmatpush1.bf16.msra.mxu0 0
    %189 = vmatprep.subr.bf16.mxu0 0
    %190 = vmatpush1.bf16.msra.mxu0 0
    %191 = vmatprep.subr.bf16.mxu0 0
    %192 = vmatpush1.bf16.msra.mxu0 0
    %193 = vmatprep.subr.bf16.mxu0 0
    %194 = vmatpush1.bf16.msra.mxu0 0
    %195 = vmatprep.subr.bf16.mxu0 0
    %196 = vmatpush1.bf16.msra.mxu0 0
    %197 = vmatprep.mubr.bf16.mxu0 0
    %198 = vmatmul.mubr.bf16.gmra.mrb[0].mxu0 %v160
    %v199 = vpop.f32.mrb[0].mxu0
    %v200 = vadd.f32 0.0, %v199
    %v201 = vpop.f32.mrb[0].mxu0
    %v202 = vpop.f32.mrb[0].mxu0
    %v203 = vadd.f32 0.0, %v202
    %v204 = vpop.f32.mrb[0].mxu0
    %205 = vmatprep.mubr.bf16.mxu0 0
    %206 = vmatmul.mubr.bf16.gmra.mrb[0].mxu0 %v163
    %v207 = vpop.f32.mrb[0].mxu0
    %v208 = vadd.f32 0.0, %v207
    %v209 = vpop.f32.mrb[0].mxu0
    %v210 = vpop.f32.mrb[0].mxu0
    %v211 = vadd.f32 0.0, %v210
    %v212 = vpop.f32.mrb[0].mxu0
    %213 = vdwg.mxu0
    %v214 = vpack.c.bf16 %v203, %v200
    %v215 = vpack.c.bf16 %v211, %v208
    %s216 = scalar_lea.vmem %s5, 64
    %v217 = vld [vmem:[%s216] sm:$0xf]
    %v218 = vld [vmem:[%s216 + $0x4] sm:$0xf]
    %v219 = vld [vmem:[%s216 + $0x8] sm:$0xf]
    %v220 = vld [vmem:[%s216 + $0xc] sm:$0xf]
    %v221 = vld [vmem:[%s216 + $0x10] sm:$0xf]
    %v222 = vld [vmem:[%s216 + $0x14] sm:$0xf]
    %v223 = vld [vmem:[%s216 + $0x18] sm:$0xf]
    %v224 = vld [vmem:[%s216 + $0x1c] sm:$0xf]
    %v225 = vld [vmem:[%s216 + $0x20] sm:$0xf]
    %v226 = vld [vmem:[%s216 + $0x24] sm:$0xf]
    %v227 = vld [vmem:[%s216 + $0x28] sm:$0xf]
    %v228 = vld [vmem:[%s216 + $0x2c] sm:$0xf]
    %v229 = vld [vmem:[%s216 + $0x30] sm:$0xf]
    %v230 = vld [vmem:[%s216 + $0x34] sm:$0xf]
    %v231 = vld [vmem:[%s216 + $0x38] sm:$0xf]
    %v232 = vld [vmem:[%s216 + $0x3c] sm:$0xf]
    %v249 = vunpack.c.l.b16 %v217
    %v250 = vunpack.c.l.b16 %v218
    %v251 = vunpack.c.l.b16 %v219
    %v252 = vunpack.c.l.b16 %v220
    %v253 = vunpack.c.l.b16 %v221
    %v254 = vunpack.c.l.b16 %v222
    %v255 = vunpack.c.l.b16 %v223
    %v256 = vunpack.c.l.b16 %v224
    %v257 = vunpack.c.l.b16 %v225
    %v258 = vunpack.c.l.b16 %v226
    %v259 = vunpack.c.l.b16 %v227
    %v260 = vunpack.c.l.b16 %v228
    %v261 = vunpack.c.l.b16 %v229
    %v262 = vunpack.c.l.b16 %v230
    %v263 = vunpack.c.l.b16 %v231
    %v264 = vunpack.c.l.b16 %v232
    %v265 = vpack.c.b16 %v250, %v249
    %v266 = vpack.c.b16 %v252, %v251
    %v267 = vpack.c.b16 %v254, %v253
    %v268 = vpack.c.b16 %v256, %v255
    %v269 = vpack.c.b16 %v258, %v257
    %v270 = vpack.c.b16 %v260, %v259
    %v271 = vpack.c.b16 %v262, %v261
    %v272 = vpack.c.b16 %v264, %v263
    %281 = vmatprep.subr.bf16.mxu0 0
    %282 = vmatpush1.bf16.msra.mxu0 %v265
    %283 = vmatprep.subr.bf16.mxu0 0
    %284 = vmatpush1.bf16.msra.mxu0 %v266
    %285 = vmatprep.subr.bf16.mxu0 0
    %286 = vmatpush1.bf16.msra.mxu0 %v267
    %287 = vmatprep.subr.bf16.mxu0 0
    %288 = vmatpush1.bf16.msra.mxu0 %v268
    %289 = vmatprep.subr.bf16.mxu0 0
    %290 = vmatpush1.bf16.msra.mxu0 %v269
    %291 = vmatprep.subr.bf16.mxu0 0
    %292 = vmatpush1.bf16.msra.mxu0 %v270
    %293 = vmatprep.subr.bf16.mxu0 0
    %294 = vmatpush1.bf16.msra.mxu0 %v271
    %295 = vmatprep.subr.bf16.mxu0 0
    %296 = vmatpush1.bf16.msra.mxu0 %v272
    %297 = vmatprep.subr.bf16.mxu0 0
    %298 = vmatpush1.bf16.msra.mxu0 0
    %299 = vmatprep.subr.bf16.mxu0 0
    %300 = vmatpush1.bf16.msra.mxu0 0
    %301 = vmatprep.subr.bf16.mxu0 0
    %302 = vmatpush1.bf16.msra.mxu0 0
    %303 = vmatprep.subr.bf16.mxu0 0
    %304 = vmatpush1.bf16.msra.mxu0 0
    %305 = vmatprep.subr.bf16.mxu0 0
    %306 = vmatpush1.bf16.msra.mxu0 0
    %307 = vmatprep.subr.bf16.mxu0 0
    %308 = vmatpush1.bf16.msra.mxu0 0
    %309 = vmatprep.subr.bf16.mxu0 0
    %310 = vmatpush1.bf16.msra.mxu0 0
    %311 = vmatprep.subr.bf16.mxu0 0
    %312 = vmatpush1.bf16.msra.mxu0 0
    %313 = vmatprep.mubr.bf16.mxu0 0
    %314 = vmatmul.mubr.bf16.gmra.mrb[0].mxu0 %v214
    %v315 = vpop.f32.mrb[0].mxu0
    %v316 = vadd.f32 0.0, %v315
    %v317 = vpop.f32.mrb[0].mxu0
    %v318 = vpop.f32.mrb[0].mxu0
    %v319 = vadd.f32 0.0, %v318
    %v320 = vpop.f32.mrb[0].mxu0
    %321 = vmatprep.mubr.bf16.mxu0 0
    %322 = vmatmul.mubr.bf16.gmra.mrb[0].mxu0 %v215
    %v323 = vpop.f32.mrb[0].mxu0
    %v324 = vadd.f32 0.0, %v323
    %v325 = vpop.f32.mrb[0].mxu0
    %v326 = vpop.f32.mrb[0].mxu0
    %v327 = vadd.f32 0.0, %v326
    %v328 = vpop.f32.mrb[0].mxu0
    %329 = vdwg.mxu0
    %v346 = vunpack.c.l.b16 %v128
    %v347 = vunpack.c.l.b16 %v129
    %v348 = vunpack.c.l.b16 %v130
    %v349 = vunpack.c.l.b16 %v131
    %v350 = vunpack.c.l.b16 %v132
    %v351 = vunpack.c.l.b16 %v133
    %v352 = vunpack.c.l.b16 %v134
    %v353 = vunpack.c.l.b16 %v135
    %v354 = vunpack.c.l.b16 %v136
    %v355 = vunpack.c.l.b16 %v137
    %v356 = vunpack.c.l.b16 %v138
    %v357 = vunpack.c.l.b16 %v139
    %v358 = vunpack.c.l.b16 %v140
    %v359 = vunpack.c.l.b16 %v141
    %v360 = vunpack.c.l.b16 %v142
    %v361 = vunpack.c.l.b16 %v143
    %v362 = vpack.c.b16 %v347, %v346
    %v363 = vpack.c.b16 %v349, %v348
    %v364 = vpack.c.b16 %v351, %v350
    %v365 = vpack.c.b16 %v353, %v352
    %v366 = vpack.c.b16 %v355, %v354
    %v367 = vpack.c.b16 %v357, %v356
    %v368 = vpack.c.b16 %v359, %v358
    %v369 = vpack.c.b16 %v361, %v360
    %378 = vmatprep.subr.bf16.mxu0 0
    %379 = vmatpush1.bf16.msra.mxu0 %v362
    %380 = vmatprep.subr.bf16.mxu0 0
    %381 = vmatpush1.bf16.msra.mxu0 %v363
    %382 = vmatprep.subr.bf16.mxu0 0
    %383 = vmatpush1.bf16.msra.mxu0 %v364
    %384 = vmatprep.subr.bf16.mxu0 0
    %385 = vmatpush1.bf16.msra.mxu0 %v365
    %386 = vmatprep.subr.bf16.mxu0 0
    %387 = vmatpush1.bf16.msra.mxu0 %v366
    %388 = vmatprep.subr.bf16.mxu0 0
    %389 = vmatpush1.bf16.msra.mxu0 %v367
    %390 = vmatprep.subr.bf16.mxu0 0
    %391 = vmatpush1.bf16.msra.mxu0 %v368
    %392 = vmatprep.subr.bf16.mxu0 0
    %393 = vmatpush1.bf16.msra.mxu0 %v369
    %394 = vmatprep.subr.bf16.mxu0 0
    %395 = vmatpush1.bf16.msra.mxu0 0
    %396 = vmatprep.subr.bf16.mxu0 0
    %397 = vmatpush1.bf16.msra.mxu0 0
    %398 = vmatprep.subr.bf16.mxu0 0
    %399 = vmatpush1.bf16.msra.mxu0 0
    %400 = vmatprep.subr.bf16.mxu0 0
    %401 = vmatpush1.bf16.msra.mxu0 0
    %402 = vmatprep.subr.bf16.mxu0 0
    %403 = vmatpush1.bf16.msra.mxu0 0
    %404 = vmatprep.subr.bf16.mxu0 0
    %405 = vmatpush1.bf16.msra.mxu0 0
    %406 = vmatprep.subr.bf16.mxu0 0
    %407 = vmatpush1.bf16.msra.mxu0 0
    %408 = vmatprep.subr.bf16.mxu0 0
    %409 = vmatpush1.bf16.msra.mxu0 0
    %410 = vmatprep.mubr.bf16.mxu0 0
    %411 = vmatmul.mubr.bf16.gmra.mrb[0].mxu0 %v126
    %v412 = vpop.f32.mrb[0].mxu0
    %v413 = vadd.f32 %v316, %v412
    %v414 = vpop.f32.mrb[0].mxu0
    %v415 = vpop.f32.mrb[0].mxu0
    %v416 = vadd.f32 %v319, %v415
    %v417 = vpop.f32.mrb[0].mxu0
    %418 = vmatprep.mubr.bf16.mxu0 0
    %419 = vmatmul.mubr.bf16.gmra.mrb[0].mxu0 %v127
    %v420 = vpop.f32.mrb[0].mxu0
    %v421 = vadd.f32 %v324, %v420
    %v422 = vpop.f32.mrb[0].mxu0
    %v423 = vpop.f32.mrb[0].mxu0
    %v424 = vadd.f32 %v327, %v423
    %v425 = vpop.f32.mrb[0].mxu0
    %426 = vdwg.mxu0
    %s427 = scalar_lea.vmem %s2, 16
    %v428 = vld [vmem:[%s427] sm:$0xf]
    %v429 = vld [vmem:[%s427 + $0x4] sm:$0xf]
    %v430 = vld [vmem:[%s427 + $0x8] sm:$0xf]
    %v431 = vld [vmem:[%s427 + $0xc] sm:$0xf]
    %v436 = vunpack.c.l.b16 %v428
    %v437 = vunpack.c.l.b16 %v429
    %v438 = vunpack.c.l.b16 %v430
    %v439 = vunpack.c.l.b16 %v431
    %v440 = vpack.c.b16 %v437, %v436
    %v441 = vpack.c.b16 %v439, %v438
    %v443 = vsel %vm158, %v440, 0
    %v446 = vsel %vm158, %v441, 0
    %448 = vmatprep.subr.bf16.mxu0 0
    %449 = vmatpush1.bf16.msra.mxu0 %v126
    %450 = vmatprep.subr.bf16.mxu0 0
    %451 = vmatpush1.bf16.msra.mxu0 %v127
    %452 = vmatprep.subr.bf16.mxu0 0
    %453 = vmatpush1.bf16.msra.mxu0 0
    %454 = vmatprep.subr.bf16.mxu0 0
    %455 = vmatpush1.bf16.msra.mxu0 0
    %456 = vmatprep.subr.bf16.mxu0 0
    %457 = vmatpush1.bf16.msra.mxu0 0
    %458 = vmatprep.subr.bf16.mxu0 0
    %459 = vmatpush1.bf16.msra.mxu0 0
    %460 = vmatprep.subr.bf16.mxu0 0
    %461 = vmatpush1.bf16.msra.mxu0 0
    %462 = vmatprep.subr.bf16.mxu0 0
    %463 = vmatpush1.bf16.msra.mxu0 0
    %464 = vmatprep.subr.bf16.mxu0 0
    %465 = vmatpush1.bf16.msra.mxu0 0
    %466 = vmatprep.subr.bf16.mxu0 0
    %467 = vmatpush1.bf16.msra.mxu0 0
    %468 = vmatprep.subr.bf16.mxu0 0
    %469 = vmatpush1.bf16.msra.mxu0 0
    %470 = vmatprep.subr.bf16.mxu0 0
    %471 = vmatpush1.bf16.msra.mxu0 0
    %472 = vmatprep.subr.bf16.mxu0 0
    %473 = vmatpush1.bf16.msra.mxu0 0
    %474 = vmatprep.subr.bf16.mxu0 0
    %475 = vmatpush1.bf16.msra.mxu0 0
    %476 = vmatprep.subr.bf16.mxu0 0
    %477 = vmatpush1.bf16.msra.mxu0 0
    %478 = vmatprep.subr.bf16.mxu0 0
    %479 = vmatpush1.bf16.msra.mxu0 0
    %480 = vmatprep.mubr.bf16.mxu0 0
    %481 = vmatmul.mubr.bf16.gmra.mrb[0].mxu0 %v443
    %v482 = vpop.f32.mrb[0].mxu0
    %v483 = vadd.f32 0.0, %v482
    %v484 = vpop.f32.mrb[0].mxu0
    %v485 = vpop.f32.mrb[0].mxu0
    %v486 = vadd.f32 0.0, %v485
    %v487 = vpop.f32.mrb[0].mxu0
    %488 = vmatprep.mubr.bf16.mxu0 0
    %489 = vmatmul.mubr.bf16.gmra.mrb[0].mxu0 %v446
    %v490 = vpop.f32.mrb[0].mxu0
    %v491 = vadd.f32 0.0, %v490
    %v492 = vpop.f32.mrb[0].mxu0
    %v493 = vpop.f32.mrb[0].mxu0
    %v494 = vadd.f32 0.0, %v493
    %v495 = vpop.f32.mrb[0].mxu0
    %496 = vdwg.mxu0
    %v497 = vpack.c.bf16 %v486, %v483
    %v498 = vpack.c.bf16 %v494, %v491
    %s499 = scalar_lea.vmem %s5, 128
    %v500 = vld [vmem:[%s499] sm:$0xf]
    %v501 = vld [vmem:[%s499 + $0x4] sm:$0xf]
    %v502 = vld [vmem:[%s499 + $0x8] sm:$0xf]
    %v503 = vld [vmem:[%s499 + $0xc] sm:$0xf]
    %v504 = vld [vmem:[%s499 + $0x10] sm:$0xf]
    %v505 = vld [vmem:[%s499 + $0x14] sm:$0xf]
    %v506 = vld [vmem:[%s499 + $0x18] sm:$0xf]
    %v507 = vld [vmem:[%s499 + $0x1c] sm:$0xf]
    %v508 = vld [vmem:[%s499 + $0x20] sm:$0xf]
    %v509 = vld [vmem:[%s499 + $0x24] sm:$0xf]
    %v510 = vld [vmem:[%s499 + $0x28] sm:$0xf]
    %v511 = vld [vmem:[%s499 + $0x2c] sm:$0xf]
    %v512 = vld [vmem:[%s499 + $0x30] sm:$0xf]
    %v513 = vld [vmem:[%s499 + $0x34] sm:$0xf]
    %v514 = vld [vmem:[%s499 + $0x38] sm:$0xf]
    %v515 = vld [vmem:[%s499 + $0x3c] sm:$0xf]
    %v532 = vunpack.c.l.b16 %v500
    %v533 = vunpack.c.l.b16 %v501
    %v534 = vunpack.c.l.b16 %v502
    %v535 = vunpack.c.l.b16 %v503
    %v536 = vunpack.c.l.b16 %v504
    %v537 = vunpack.c.l.b16 %v505
    %v538 = vunpack.c.l.b16 %v506
    %v539 = vunpack.c.l.b16 %v507
    %v540 = vunpack.c.l.b16 %v508
    %v541 = vunpack.c.l.b16 %v509
    %v542 = vunpack.c.l.b16 %v510
    %v543 = vunpack.c.l.b16 %v511
    %v544 = vunpack.c.l.b16 %v512
    %v545 = vunpack.c.l.b16 %v513
    %v546 = vunpack.c.l.b16 %v514
    %v547 = vunpack.c.l.b16 %v515
    %v548 = vpack.c.b16 %v533, %v532
    %v549 = vpack.c.b16 %v535, %v534
    %v550 = vpack.c.b16 %v537, %v536
    %v551 = vpack.c.b16 %v539, %v538
    %v552 = vpack.c.b16 %v541, %v540
    %v553 = vpack.c.b16 %v543, %v542
    %v554 = vpack.c.b16 %v545, %v544
    %v555 = vpack.c.b16 %v547, %v546
    %564 = vmatprep.subr.bf16.mxu0 0
    %565 = vmatpush1.bf16.msra.mxu0 %v548
    %566 = vmatprep.subr.bf16.mxu0 0
    %567 = vmatpush1.bf16.msra.mxu0 %v549
    %568 = vmatprep.subr.bf16.mxu0 0
    %569 = vmatpush1.bf16.msra.mxu0 %v550
    %570 = vmatprep.subr.bf16.mxu0 0
    %571 = vmatpush1.bf16.msra.mxu0 %v551
    %572 = vmatprep.subr.bf16.mxu0 0
    %573 = vmatpush1.bf16.msra.mxu0 %v552
    %574 = vmatprep.subr.bf16.mxu0 0
    %575 = vmatpush1.bf16.msra.mxu0 %v553
    %576 = vmatprep.subr.bf16.mxu0 0
    %577 = vmatpush1.bf16.msra.mxu0 %v554
    %578 = vmatprep.subr.bf16.mxu0 0
    %579 = vmatpush1.bf16.msra.mxu0 %v555
    %580 = vmatprep.subr.bf16.mxu0 0
    %581 = vmatpush1.bf16.msra.mxu0 0
    %582 = vmatprep.subr.bf16.mxu0 0
    %583 = vmatpush1.bf16.msra.mxu0 0
    %584 = vmatprep.subr.bf16.mxu0 0
    %585 = vmatpush1.bf16.msra.mxu0 0
    %586 = vmatprep.subr.bf16.mxu0 0
    %587 = vmatpush1.bf16.msra.mxu0 0
    %588 = vmatprep.subr.bf16.mxu0 0
    %589 = vmatpush1.bf16.msra.mxu0 0
    %590 = vmatprep.subr.bf16.mxu0 0
    %591 = vmatpush1.bf16.msra.mxu0 0
    %592 = vmatprep.subr.bf16.mxu0 0
    %593 = vmatpush1.bf16.msra.mxu0 0
    %594 = vmatprep.subr.bf16.mxu0 0
    %595 = vmatpush1.bf16.msra.mxu0 0
    %596 = vmatprep.mubr.bf16.mxu0 0
    %597 = vmatmul.mubr.bf16.gmra.mrb[0].mxu0 %v497
    %v598 = vpop.f32.mrb[0].mxu0
    %v599 = vadd.f32 0.0, %v598
    %v600 = vpop.f32.mrb[0].mxu0
    %v601 = vpop.f32.mrb[0].mxu0
    %v602 = vadd.f32 0.0, %v601
    %v603 = vpop.f32.mrb[0].mxu0
    %604 = vmatprep.mubr.bf16.mxu0 0
    %605 = vmatmul.mubr.bf16.gmra.mrb[0].mxu0 %v498
    %v606 = vpop.f32.mrb[0].mxu0
    %v607 = vadd.f32 0.0, %v606
    %v608 = vpop.f32.mrb[0].mxu0
    %v609 = vpop.f32.mrb[0].mxu0
    %v610 = vadd.f32 0.0, %v609
    %v611 = vpop.f32.mrb[0].mxu0
    %612 = vdwg.mxu0
    %v613 = vadd.f32 %v413, %v599
    %v614 = vadd.f32 %v416, %v602
    %v615 = vadd.f32 %v421, %v607
    %v616 = vadd.f32 %v424, %v610
    %v617 = vld [vmem:[%s6] sm:$0x1]
    %v619 = vlaneseq
    %v620 = vshrl.u32 %v619, 7
    %v621 = vsub.s32 0, %v620
    %v622 = vrot.slane %v617, %v621
    %v624 = vadd.f32 %v613, %v622
    %v625 = vadd.f32 %v614, %v622
    %v626 = vadd.f32 %v615, %v622
    %v627 = vadd.f32 %v616, %v622
    %v628 = vmax.f32 %v624, 0.0
    %v629 = vmax.f32 %v625, 0.0
    %v630 = vmax.f32 %v626, 0.0
    %v631 = vmax.f32 %v627, 0.0
    %v632 = vpack.c.bf16 %v629, %v628
    %v633 = vpack.c.bf16 %v631, %v630
    %v634 = vld [vmem:[%s1] sm:$0x1]
    %v636 = vsel %vm158, %v634, 0
    %638 = vmatprep.subr.bf16.mxu0 0
    %639 = vmatpush1.bf16.msra.mxu0 %v632
    %640 = vmatprep.subr.bf16.mxu0 0
    %641 = vmatpush1.bf16.msra.mxu0 %v633
    %642 = vmatprep.subr.bf16.mxu0 0
    %643 = vmatpush1.bf16.msra.mxu0 0
    %644 = vmatprep.subr.bf16.mxu0 0
    %645 = vmatpush1.bf16.msra.mxu0 0
    %646 = vmatprep.subr.bf16.mxu0 0
    %647 = vmatpush1.bf16.msra.mxu0 0
    %648 = vmatprep.subr.bf16.mxu0 0
    %649 = vmatpush1.bf16.msra.mxu0 0
    %650 = vmatprep.subr.bf16.mxu0 0
    %651 = vmatpush1.bf16.msra.mxu0 0
    %652 = vmatprep.subr.bf16.mxu0 0
    %653 = vmatpush1.bf16.msra.mxu0 0
    %654 = vmatprep.subr.bf16.mxu0 0
    %655 = vmatpush1.bf16.msra.mxu0 0
    %656 = vmatprep.subr.bf16.mxu0 0
    %657 = vmatpush1.bf16.msra.mxu0 0
    %658 = vmatprep.subr.bf16.mxu0 0
    %659 = vmatpush1.bf16.msra.mxu0 0
    %660 = vmatprep.subr.bf16.mxu0 0
    %661 = vmatpush1.bf16.msra.mxu0 0
    %662 = vmatprep.subr.bf16.mxu0 0
    %663 = vmatpush1.bf16.msra.mxu0 0
    %664 = vmatprep.subr.bf16.mxu0 0
    %665 = vmatpush1.bf16.msra.mxu0 0
    %666 = vmatprep.subr.bf16.mxu0 0
    %667 = vmatpush1.bf16.msra.mxu0 0
    %668 = vmatprep.subr.bf16.mxu0 0
    %669 = vmatpush1.bf16.msra.mxu0 0
    %670 = vmatprep.mubr.bf16.mxu0 0
    %671 = vmatmul.mubr.bf16.gmra.mrb[0].mxu0 %v636
    %v672 = vpop.f32.mrb[0].mxu0
    %v673 = vadd.f32 0.0, %v672
    %v674 = vpop.f32.mrb[0].mxu0
    %v675 = vpop.f32.mrb[0].mxu0
    %v676 = vpop.f32.mrb[0].mxu0
    %677 = vdwg.mxu0
    %v678 = vpack.c.bf16 %v673, %v673
    %v679 = vld [vmem:[%s7] sm:$0xf]
    %v680 = vld [vmem:[%s7 + $0x4] sm:$0xf]
    %v681 = vld [vmem:[%s7 + $0x8] sm:$0xf]
    %v682 = vld [vmem:[%s7 + $0xc] sm:$0xf]
    %v683 = vld [vmem:[%s7 + $0x10] sm:$0xf]
    %v684 = vld [vmem:[%s7 + $0x14] sm:$0xf]
    %v685 = vld [vmem:[%s7 + $0x18] sm:$0xf]
    %v686 = vld [vmem:[%s7 + $0x1c] sm:$0xf]
    %v687 = vld [vmem:[%s7 + $0x20] sm:$0xf]
    %v688 = vld [vmem:[%s7 + $0x24] sm:$0xf]
    %v689 = vld [vmem:[%s7 + $0x28] sm:$0xf]
    %v690 = vld [vmem:[%s7 + $0x2c] sm:$0xf]
    %v691 = vld [vmem:[%s7 + $0x30] sm:$0xf]
    %v692 = vld [vmem:[%s7 + $0x34] sm:$0xf]
    %v693 = vld [vmem:[%s7 + $0x38] sm:$0xf]
    %v694 = vld [vmem:[%s7 + $0x3c] sm:$0xf]
    %v695 = vld [vmem:[%s8] sm:$0x1]
    %v697 = vlaneseq
    %v698 = vshrl.u32 %v697, 7
    %v699 = vsub.s32 0, %v698
    %v700 = vrot.slane %v695, %v699
    %v718 = vunpack.c.l.b16 %v679
    %v719 = vunpack.c.l.b16 %v680
    %v720 = vunpack.c.l.b16 %v681
    %v721 = vunpack.c.l.b16 %v682
    %v722 = vunpack.c.l.b16 %v683
    %v723 = vunpack.c.l.b16 %v684
    %v724 = vunpack.c.l.b16 %v685
    %v725 = vunpack.c.l.b16 %v686
    %v726 = vunpack.c.l.b16 %v687
    %v727 = vunpack.c.l.b16 %v688
    %v728 = vunpack.c.l.b16 %v689
    %v729 = vunpack.c.l.b16 %v690
    %v730 = vunpack.c.l.b16 %v691
    %v731 = vunpack.c.l.b16 %v692
    %v732 = vunpack.c.l.b16 %v693
    %v733 = vunpack.c.l.b16 %v694
    %v734 = vpack.c.b16 %v719, %v718
    %v735 = vpack.c.b16 %v721, %v720
    %v736 = vpack.c.b16 %v723, %v722
    %v737 = vpack.c.b16 %v725, %v724
    %v738 = vpack.c.b16 %v727, %v726
    %v739 = vpack.c.b16 %v729, %v728
    %v740 = vpack.c.b16 %v731, %v730
    %v741 = vpack.c.b16 %v733, %v732
    %750 = vmatprep.subr.bf16.mxu0 0
    %751 = vmatpush1.bf16.msra.mxu0 %v734
    %752 = vmatprep.subr.bf16.mxu0 0
    %753 = vmatpush1.bf16.msra.mxu0 %v735
    %754 = vmatprep.subr.bf16.mxu0 0
    %755 = vmatpush1.bf16.msra.mxu0 %v736
    %756 = vmatprep.subr.bf16.mxu0 0
    %757 = vmatpush1.bf16.msra.mxu0 %v737
    %758 = vmatprep.subr.bf16.mxu0 0
    %759 = vmatpush1.bf16.msra.mxu0 %v738
    %760 = vmatprep.subr.bf16.mxu0 0
    %761 = vmatpush1.bf16.msra.mxu0 %v739
    %762 = vmatprep.subr.bf16.mxu0 0
    %763 = vmatpush1.bf16.msra.mxu0 %v740
    %764 = vmatprep.subr.bf16.mxu0 0
    %765 = vmatpush1.bf16.msra.mxu0 %v741
    %766 = vmatprep.subr.bf16.mxu0 0
    %767 = vmatpush1.bf16.msra.mxu0 0
    %768 = vmatprep.subr.bf16.mxu0 0
    %769 = vmatpush1.bf16.msra.mxu0 0
    %770 = vmatprep.subr.bf16.mxu0 0
    %771 = vmatpush1.bf16.msra.mxu0 0
    %772 = vmatprep.subr.bf16.mxu0 0
    %773 = vmatpush1.bf16.msra.mxu0 0
    %774 = vmatprep.subr.bf16.mxu0 0
    %775 = vmatpush1.bf16.msra.mxu0 0
    %776 = vmatprep.subr.bf16.mxu0 0
    %777 = vmatpush1.bf16.msra.mxu0 0
    %778 = vmatprep.subr.bf16.mxu0 0
    %779 = vmatpush1.bf16.msra.mxu0 0
    %780 = vmatprep.subr.bf16.mxu0 0
    %781 = vmatpush1.bf16.msra.mxu0 0
    %782 = vmatprep.mubr.bf16.mxu0 0
    %783 = vmatmul.mubr.bf16.gmra.mrb[0].mxu0 %v678
    %v784 = vpop.f32.mrb[0].mxu0
    %v785 = vadd.f32 %v700, %v784
    %v786 = vpop.f32.mrb[0].mxu0
    %v787 = vpop.f32.mrb[0].mxu0
    %v788 = vpop.f32.mrb[0].mxu0
    %789 = vdwg.mxu0
    %790 = vst [vmem:[#allocation2] sm:$0x3] %v785
    // Predicated region
    $region38: #{cnn_model_forward.1} parent=1 // pred_check
      _
    $region39: #{cnn_model_forward.1} parent=1 // pred_check_branch
      %792 = sbr.rel (0) target = $region41
    $region40: #{cnn_model_forward.1} parent=1 // pred_region
      %s794 = ssub.s32 32, 32
      %795 = vsyncadd [#allocation3], %s794
      %s797 = sshll.u32 [#allocation2], 4
      %s798 = int_to_ptr.vmem [resolvable:$true] %s797
      %800 = dma.vmem_to_hbm [thread:$0]  %s798, 32, %s9, [#allocation3]
    $region41: #{cnn_model_forward.1} parent=1 // pred_fallthru
      _
    // Predicated region
    $region42: #{cnn_model_forward.1} parent=1 // pred_check
      _
    $region43: #{cnn_model_forward.1} parent=1 // pred_check_branch
      %802 = sbr.rel (0) target = $region45
    $region44: #{cnn_model_forward.1} parent=1 // pred_region
      %803 = dma.done [#allocation3], 32
    $region45: #{cnn_model_forward.1} parent=1 // pred_fallthru
      _
    %804 = vsyncpa [#allocation3], 1

</llo_original>
